<compile_context>
chip_gen: v7x
topology: tpu7x:2x2x1
jax: 0.10.0
libtpu: 0.0.40
codegen_flags: <defaults>
</compile_context>

<pallas_src>
import math
import functools

import jax
import jax.numpy as jnp
from jax.experimental import pallas as pl
from jax.experimental.pallas import tpu as pltpu

_LANE = 128      # vreg lane width   (last-dim tiling unit)
_SUBLANE = 8     # vreg sublane count (second-to-last-dim tiling unit)


def _round_up(v, m):
    return -(-v // m) * m


def _vmem_capacity_bytes():
    """Best-effort VMEM capacity query; conservative fallback (v7x per-TC)."""
    try:
        info = pltpu.get_tpu_info()
        cap = getattr(info, "vmem_capacity_bytes", None)
        if cap:
            return int(cap)
    except Exception:
        pass
    return 64 * 1024 * 1024


def _linear_kernel_f32(x_ref, w_ref, b_ref, o_ref):
    """f32 output: accumulate directly into the output tile (resident over k)."""
    k = pl.program_id(2)

    @pl.when(k == 0)
    def _():
        o_ref[...] = jnp.zeros_like(o_ref)

    o_ref[...] += jnp.dot(
        x_ref[...], w_ref[...], preferred_element_type=jnp.float32
    )

    @pl.when(k == pl.num_programs(2) - 1)
    def _():
        # bias tile is (1, tn); broadcasts over the tm rows of the tile.
        o_ref[...] += b_ref[...].astype(o_ref.dtype)


def _linear_kernel_acc(x_ref, w_ref, b_ref, o_ref, acc_ref):
    """Narrow output dtypes: accumulate in f32 VMEM scratch, cast at the end."""
    k = pl.program_id(2)

    @pl.when(k == 0)
    def _():
        acc_ref[...] = jnp.zeros_like(acc_ref)

    acc_ref[...] += jnp.dot(
        x_ref[...], w_ref[...], preferred_element_type=jnp.float32
    )

    @pl.when(k == pl.num_programs(2) - 1)
    def _():
        o_ref[...] = (acc_ref[...] + b_ref[...].astype(jnp.float32)).astype(
            o_ref.dtype
        )


@functools.partial(jax.jit, static_argnames=("tm", "tn", "tk"))
def linear_forward(x, weight, bias, *, tm=None, tn=None, tk=None):
    """Pallas implementation of LinearBase.forward: x @ W + bias.

    x:      [M, K]  (batch, in_features)
    weight: [K, N]  (in_features, out_features)
    bias:   [1, N]
    """
    M, K = x.shape
    K2, N = weight.shape
    assert K == K2, "in_features mismatch"
    assert bias.shape == (1, N)

    out_dtype = x.dtype
    itemsize = jnp.dtype(x.dtype).itemsize
    out_itemsize = jnp.dtype(out_dtype).itemsize
    bias_itemsize = jnp.dtype(bias.dtype).itemsize
    needs_acc = out_dtype != jnp.float32

    def _est_vmem(tm_, tn_, tk_):
        # Pallas double-buffers every BlockSpec operand by default.
        b = 2 * tm_ * tk_ * itemsize            # x tiles
        b += 2 * tk_ * tn_ * itemsize           # W tiles
        b += 2 * 1 * tn_ * bias_itemsize        # bias tiles
        b += 2 * tm_ * tn_ * out_itemsize       # output tiles
        if needs_acc:
            b += tm_ * tn_ * 4                  # f32 accumulator scratch
        return b

    vmem_cap = _vmem_capacity_bytes()

    # ---- tile selection --------------------------------------------------
    # Streaming-tiled defaults: lane-dense (multiple-of-128) N/K tiles,
    # sublane-aligned M tile, 256-wide M/N for the MXU, bigger K for bf16.
    tm_d = min(_round_up(M, _SUBLANE), 256)
    tn_d = min(_round_up(N, _LANE), 256)
    tk_d = min(_round_up(K, _LANE), 512 if itemsize <= 2 else 256)

    # Weight-stationary candidate: keep all of (padded) W resident so it is
    # DMA'd from HBM exactly once while x / output blocks stream over batch.
    ws_tn = _round_up(N, _LANE)
    ws_tk = _round_up(K, _LANE)

    if tm is None:
        tm = tm_d
    if tn is None and tk is None:
        if _est_vmem(tm, ws_tn, ws_tk) <= vmem_cap // 2:
            tn, tk = ws_tn, ws_tk            # weight-stationary
        else:
            tn, tk = tn_d, tk_d              # fully tiled streaming
    else:
        tn = tn_d if tn is None else tn
        tk = tk_d if tk is None else tk

    # ---- pad to tile multiples (zero padding is matmul-neutral) ----------
    Mp, Np, Kp = _round_up(M, tm), _round_up(N, tn), _round_up(K, tk)
    if (Mp, Kp) != (M, K):
        x = jnp.pad(x, ((0, Mp - M), (0, Kp - K)))
    if (Kp, Np) != (K, N):
        weight = jnp.pad(weight, ((0, Kp - K), (0, Np - N)))
    if Np != N:
        bias = jnp.pad(bias, ((0, 0), (0, Np - N)))

    grid = (Mp // tm, Np // tn, Kp // tk)

    if needs_acc:
        kernel = _linear_kernel_acc
        scratch_shapes = [pltpu.VMEM((tm, tn), jnp.float32)]
    else:
        kernel = _linear_kernel_f32
        scratch_shapes = []

    vmem_limit = int(
        max(32 << 20, min(_est_vmem(tm, tn, tk) + (8 << 20), vmem_cap - (8 << 20)))
    )

    cost = pl.CostEstimate(
        flops=2 * M * N * K,
        transcendentals=0,
        bytes_accessed=(M * K + K * N + N) * itemsize + M * N * out_itemsize,
    )

    out = pl.pallas_call(
        kernel,
        out_shape=jax.ShapeDtypeStruct((Mp, Np), out_dtype),
        grid_spec=pltpu.PrefetchScalarGridSpec(
            num_scalar_prefetch=0,
            grid=grid,
            in_specs=[
                pl.BlockSpec((tm, tk), lambda i, j, k: (i, k)),   # x tile
                pl.BlockSpec((tk, tn), lambda i, j, k: (k, j)),   # W tile
                pl.BlockSpec((1, tn), lambda i, j, k: (0, j)),    # bias tile
            ],
            out_specs=pl.BlockSpec((tm, tn), lambda i, j, k: (i, j)),
            scratch_shapes=scratch_shapes,
        ),
        compiler_params=pltpu.CompilerParams(
            dimension_semantics=("parallel", "parallel", "arbitrary"),
            vmem_limit_bytes=vmem_limit,
        ),
        cost_estimate=cost,
    )(x, weight, bias)

    if (Mp, Np) != (M, N):
        out = out[:M, :N]
    return out


def init_linear_base_params(key, insize, outsize, bias=True, dtype=jnp.float32):
    """Deterministic stand-in for the PyTorch __init__.

    weight: kaiming_uniform_(a=sqrt(5)) on a (insize, outsize) tensor
            -> uniform(-bound, bound) with bound = sqrt(6 / ((1 + a^2) * fan_in)),
               fan_in = outsize (PyTorch fan_in of a 2-D tensor is dim 1).
    bias:   zeros if bias=False, else uniform(-1/sqrt(insize), 1/sqrt(insize)),
            shape (1, outsize).
    """
    kw, kb = jax.random.split(key)
    a = math.sqrt(5.0)
    fan_in = outsize
    gain = math.sqrt(2.0 / (1.0 + a * a))
    w_bound = gain * math.sqrt(3.0 / fan_in)
    weight = jax.random.uniform(
        kw, (insize, outsize), dtype=dtype, minval=-w_bound, maxval=w_bound
    )
    if bias:
        b_bound = 1.0 / math.sqrt(insize)
        b = jax.random.uniform(
            kb, (1, outsize), dtype=dtype, minval=-b_bound, maxval=b_bound
        )
    else:
        b = jnp.zeros((1, outsize), dtype=dtype)
    return weight, b


if __name__ == "__main__":
    key = jax.random.PRNGKey(0)
    kx, kp, kx2, kp2 = jax.random.split(key, 4)

    # Primary run: small shapes matching the module's (batch, in_features) input.
    batch, insize, outsize = 8, 32, 32
    x = jax.random.normal(kx, (batch, insize), dtype=jnp.float32)
    weight, bias = init_linear_base_params(kp, insize, outsize, bias=True)

    out = jax.block_until_ready(linear_forward(x, weight, bias))
    ref = x @ weight + bias
    assert out.shape == (batch, outsize)
    assert jnp.allclose(out, ref, atol=1e-5, rtol=1e-5), "mismatch vs reference"

    # Ragged shapes exercise the padding / lane-dense tiling path.
    b2, i2, o2 = 6, 20, 36
    x2 = jax.random.normal(kx2, (b2, i2), dtype=jnp.float32)
    w2, bias2 = init_linear_base_params(kp2, i2, o2, bias=True)
    out2 = jax.block_until_ready(linear_forward(x2, w2, bias2))
    ref2 = x2 @ w2 + bias2
    assert out2.shape == (b2, o2)
    assert jnp.allclose(out2, ref2, atol=1e-5, rtol=1e-5), "ragged mismatch"

    print("KERNEL_OK")
</pallas_src>

<mosaic_0001>
module attributes {stable_mosaic.version = 11 : i64} {
  func.func @_linear_kernel_f32(%arg0: i32, %arg1: i32, %arg2: i32, %arg3: memref<8x128xf32, #tpu.memory_space<vmem>>, %arg4: memref<128x128xf32, #tpu.memory_space<vmem>>, %arg5: memref<1x128xf32, #tpu.memory_space<vmem>>, %arg6: memref<8x128xf32, #tpu.memory_space<vmem>>) attributes {dimension_semantics = [#tpu.dimension_semantics<parallel>, #tpu.dimension_semantics<parallel>, #tpu.dimension_semantics<arbitrary>], iteration_bounds = array<i64: 1, 1, 1>, scalar_prefetch = 0 : i64, scratch_operands = 0 : i64, tpu.core_type = #tpu.core_type<tc>, window_params = [{transform_indices = @transform_0, window_bounds = array<i64: 8, 128>}, {transform_indices = @transform_1, window_bounds = array<i64: 128, 128>}, {transform_indices = @transform_2, window_bounds = array<i64: 1, 128>}, {transform_indices = @transform_3, window_bounds = array<i64: 8, 128>}]} {
    %c0_i32 = arith.constant 0 : i32
    %0 = arith.cmpi eq, %arg2, %c0_i32 : i32
    %1 = arith.extui %0 : i1 to i32
    %c0_i32_0 = arith.constant 0 : i32
    %2 = arith.cmpi ne, %1, %c0_i32_0 : i32
    scf.if %2 {
      %cst_10 = arith.constant 0.000000e+00 : f32
      %12 = vector.broadcast %cst_10 : f32 to vector<8x128xf32>
      %c0_11 = arith.constant 0 : index
      %c0_12 = arith.constant 0 : index
      %13 = vector.load %arg6[%c0_11, %c0_12] : memref<8x128xf32, #tpu.memory_space<vmem>>, vector<8x128xf32>
      tpu.vector_store %arg6[%c0_11, %c0_12], %12 {strides = array<i32>} : memref<8x128xf32, #tpu.memory_space<vmem>>, vector<8x128xf32>,
    } else {
    }
    %c0 = arith.constant 0 : index
    %c0_1 = arith.constant 0 : index
    %3 = vector.load %arg6[%c0, %c0_1] : memref<8x128xf32, #tpu.memory_space<vmem>>, vector<8x128xf32>
    %c0_2 = arith.constant 0 : index
    %c0_3 = arith.constant 0 : index
    %4 = vector.load %arg3[%c0_2, %c0_3] : memref<8x128xf32, #tpu.memory_space<vmem>>, vector<8x128xf32>
    %c0_4 = arith.constant 0 : index
    %c0_5 = arith.constant 0 : index
    %5 = vector.load %arg4[%c0_4, %c0_5] : memref<128x128xf32, #tpu.memory_space<vmem>>, vector<128x128xf32>
    %cst = arith.constant dense<0.000000e+00> : vector<8x128xf32>
    %6 = tpu.matmul %4, %5, %cst {dimension_numbers = #tpu.dot_dimension_numbers<[1], [0], [0], [1], [0, 0, 1, 1], [], []>} : vector<8x128xf32>, vector<128x128xf32>, vector<8x128xf32> -> vector<8x128xf32>
    %7 = arith.addf %3, %6 : vector<8x128xf32>
    %c0_6 = arith.constant 0 : index
    %c0_7 = arith.constant 0 : index
    %8 = vector.load %arg6[%c0_6, %c0_7] : memref<8x128xf32, #tpu.memory_space<vmem>>, vector<8x128xf32>
    tpu.vector_store %arg6[%c0_6, %c0_7], %7 {strides = array<i32>} : memref<8x128xf32, #tpu.memory_space<vmem>>, vector<8x128xf32>,
    %c0_i32_8 = arith.constant 0 : i32
    %9 = arith.cmpi eq, %arg2, %c0_i32_8 : i32
    %10 = arith.extui %9 : i1 to i32
    %c0_i32_9 = arith.constant 0 : i32
    %11 = arith.cmpi ne, %10, %c0_i32_9 : i32
    scf.if %11 {
      %c0_10 = arith.constant 0 : index
      %c0_11 = arith.constant 0 : index
      %12 = vector.load %arg6[%c0_10, %c0_11] : memref<8x128xf32, #tpu.memory_space<vmem>>, vector<8x128xf32>
      %c0_12 = arith.constant 0 : index
      %c0_13 = arith.constant 0 : index
      %13 = vector.load %arg5[%c0_12, %c0_13] : memref<1x128xf32, #tpu.memory_space<vmem>>, vector<1x128xf32>
      %14 = vector.broadcast %13 : vector<1x128xf32> to vector<8x128xf32>
      %15 = arith.addf %12, %14 : vector<8x128xf32>
      %c0_14 = arith.constant 0 : index
      %c0_15 = arith.constant 0 : index
      %16 = vector.load %arg6[%c0_14, %c0_15] : memref<8x128xf32, #tpu.memory_space<vmem>>, vector<8x128xf32>
      tpu.vector_store %arg6[%c0_14, %c0_15], %15 {strides = array<i32>} : memref<8x128xf32, #tpu.memory_space<vmem>>, vector<8x128xf32>,
    } else {
    }
    return
  }
  func.func @transform_0(%arg0: i32, %arg1: i32, %arg2: i32) -> (i32, i32) {
    %c0_i32 = arith.constant 0 : i32
    return %arg0, %arg2 : i32, i32
  }
  func.func @transform_1(%arg0: i32, %arg1: i32, %arg2: i32) -> (i32, i32) {
    %c0_i32 = arith.constant 0 : i32
    return %arg2, %arg1 : i32, i32
  }
  func.func @transform_2(%arg0: i32, %arg1: i32, %arg2: i32) -> (i32, i32) {
    %c0_i32 = arith.constant 0 : i32
    %c0_i32_0 = arith.constant 0 : i32
    return %c0_i32, %arg1 : i32, i32
  }
  func.func @transform_3(%arg0: i32, %arg1: i32, %arg2: i32) -> (i32, i32) {
    %c0_i32 = arith.constant 0 : i32
    return %arg0, %arg1 : i32, i32
  }
}

</mosaic_0001>

<llo_original>
// kernel: linear_forward.1
$region0: #{linear_forward.1}
  #allocation0 [shape = 'u32[]', space=smem, size = 0x4, offset = 0x4, fixed_abs, tag = 'smem constant byte address 0x4 - core index']
  #allocation1 [shape = 'u32[144,128]{1,0:T(1,128)}', space=vmem, size = 0x12000, scoped, tag = 'internal scratch']
  %s0 = inlined_call_operand.vmem [shape: f32[8,128], index: 0, kind: input, shape index: {}]
  %s1 = inlined_call_operand.vmem [shape: f32[128,128], index: 1, kind: input, shape index: {}]
  %s2 = inlined_call_operand.vmem [shape: f32[1,128], index: 2, kind: input, shape index: {}]
  %s3 = inlined_call_operand.hbm [shape: f32[8,128], index: 3, kind: output, shape index: {}]
  %s4 = sld [smem:[#allocation0]]
  $region30: #{linear_forward.1} parent=0
    _
  %s6 = ssub.s32 1, %s4
  %s7 = scalar_select 0, %s6, %s4
  $region1: #{linear_forward.1} parent=0
    #allocation2 [shape = 'u8[4096]{0}', space=vmem, size = 0x1000, scoped, tag = 'output window, operand 0, single buffered']
    #allocation3 [shape = 's32[1]{0}', space=sflag, size = 0x4, scoped, tag = 'scoped memory for linear_forward.1']
    %8 = vsyncpa [#allocation3], 0
    // Predicated region
    $region2: #{linear_forward.1} parent=1 // pred_check
      _
    $region3: #{linear_forward.1} parent=1 // pred_check_branch
      %10 = sbr.rel (0) target = $region5
    $region4: #{linear_forward.1} parent=1 // pred_region
      _
    $region5: #{linear_forward.1} parent=1 // pred_fallthru
      _
    // Predicated region
    $region6: #{linear_forward.1} parent=1 // pred_check
      _
    $region7: #{linear_forward.1} parent=1 // pred_check_branch
      %12 = sbr.rel (0) target = $region9
    $region8: #{linear_forward.1} parent=1 // pred_region
      _
    $region9: #{linear_forward.1} parent=1 // pred_fallthru
      _
    // Predicated region
    $region10: #{linear_forward.1} parent=1 // pred_check
      _
    $region11: #{linear_forward.1} parent=1 // pred_check_branch
      %14 = sbr.rel (0) target = $region13
    $region12: #{linear_forward.1} parent=1 // pred_region
      _
    $region13: #{linear_forward.1} parent=1 // pred_fallthru
      _
    %p15 = scmp.eq.s32.totalorder 0, 0
    // Predicated region
    $region14: #{linear_forward.1} parent=1 // pred_check
      %p16 = pneg %p15
    $region15: #{linear_forward.1} parent=1 // pred_check_branch
      %18 = sbr.rel (%p16) target = $region17
    $region16: #{linear_forward.1} parent=1 // pred_region
      %19 = vst [vmem:[#allocation2] sm:$0xff] 0.0
    $region17: #{linear_forward.1} parent=1 // pred_fallthru
      _
    %v20 = vld [vmem:[#allocation2] sm:$0xff]
    %v21 = vld [vmem:[%s0] sm:$0xff]
    %v22 = vld [vmem:[%s1] sm:$0xff]
    %v23 = vld [vmem:[%s1 + $0x8] sm:$0xff]
    %v24 = vld [vmem:[%s1 + $0x10] sm:$0xff]
    %v25 = vld [vmem:[%s1 + $0x18] sm:$0xff]
    %v26 = vld [vmem:[%s1 + $0x20] sm:$0xff]
    %v27 = vld [vmem:[%s1 + $0x28] sm:$0xff]
    %v28 = vld [vmem:[%s1 + $0x30] sm:$0xff]
    %v29 = vld [vmem:[%s1 + $0x38] sm:$0xff]
    %v30 = vld [vmem:[%s1 + $0x40] sm:$0xff]
    %v31 = vld [vmem:[%s1 + $0x48] sm:$0xff]
    %v32 = vld [vmem:[%s1 + $0x50] sm:$0xff]
    %v33 = vld [vmem:[%s1 + $0x58] sm:$0xff]
    %v34 = vld [vmem:[%s1 + $0x60] sm:$0xff]
    %v35 = vld [vmem:[%s1 + $0x68] sm:$0xff]
    %v36 = vld [vmem:[%s1 + $0x70] sm:$0xff]
    %v37 = vld [vmem:[%s1 + $0x78] sm:$0xff]
    %38 = vmatprep.subr.mxu0 0.0
    %39 = vmatpush1.msra.mxu0 %v22
    %40 = vmatprep.subr.mxu0 0.0
    %41 = vmatpush1.msra.mxu0 %v23
    %42 = vmatprep.subr.mxu0 0.0
    %43 = vmatpush1.msra.mxu0 %v24
    %44 = vmatprep.subr.mxu0 0.0
    %45 = vmatpush1.msra.mxu0 %v25
    %46 = vmatprep.subr.mxu0 0.0
    %47 = vmatpush1.msra.mxu0 %v26
    %48 = vmatprep.subr.mxu0 0.0
    %49 = vmatpush1.msra.mxu0 %v27
    %50 = vmatprep.subr.mxu0 0.0
    %51 = vmatpush1.msra.mxu0 %v28
    %52 = vmatprep.subr.mxu0 0.0
    %53 = vmatpush1.msra.mxu0 %v29
    %54 = vmatprep.subr.mxu0 0.0
    %55 = vmatpush1.msra.mxu0 %v30
    %56 = vmatprep.subr.mxu0 0.0
    %57 = vmatpush1.msra.mxu0 %v31
    %58 = vmatprep.subr.mxu0 0.0
    %59 = vmatpush1.msra.mxu0 %v32
    %60 = vmatprep.subr.mxu0 0.0
    %61 = vmatpush1.msra.mxu0 %v33
    %62 = vmatprep.subr.mxu0 0.0
    %63 = vmatpush1.msra.mxu0 %v34
    %64 = vmatprep.subr.mxu0 0.0
    %65 = vmatpush1.msra.mxu0 %v35
    %66 = vmatprep.subr.mxu0 0.0
    %67 = vmatpush1.msra.mxu0 %v36
    %68 = vmatprep.subr.mxu0 0.0
    %69 = vmatpush1.msra.mxu0 %v37
    %70 = vmatprep.subr.mxu0 0.0
    %71 = vmatpush1.msra.mxu0 0.0
    %72 = vmatprep.subr.mxu0 0.0
    %73 = vmatpush1.msra.mxu0 0.0
    %74 = vmatprep.subr.mxu0 0.0
    %75 = vmatpush1.msra.mxu0 0.0
    %76 = vmatprep.subr.mxu0 0.0
    %77 = vmatpush1.msra.mxu0 0.0
    %78 = vmatprep.subr.mxu0 0.0
    %79 = vmatpush1.msra.mxu0 0.0
    %80 = vmatprep.subr.mxu0 0.0
    %81 = vmatpush1.msra.mxu0 0.0
    %82 = vmatprep.subr.mxu0 0.0
    %83 = vmatpush1.msra.mxu0 0.0
    %84 = vmatprep.subr.mxu0 0.0
    %85 = vmatpush1.msra.mxu0 0.0
    %86 = vmatprep.subr.mxu0 0.0
    %87 = vmatpush1.msra.mxu0 0.0
    %88 = vmatprep.subr.mxu0 0.0
    %89 = vmatpush1.msra.mxu0 0.0
    %90 = vmatprep.subr.mxu0 0.0
    %91 = vmatpush1.msra.mxu0 0.0
    %92 = vmatprep.subr.mxu0 0.0
    %93 = vmatpush1.msra.mxu0 0.0
    %94 = vmatprep.subr.mxu0 0.0
    %95 = vmatpush1.msra.mxu0 0.0
    %96 = vmatprep.subr.mxu0 0.0
    %97 = vmatpush1.msra.mxu0 0.0
    %98 = vmatprep.subr.mxu0 0.0
    %99 = vmatpush1.msra.mxu0 0.0
    %100 = vmatprep.subr.mxu0 0.0
    %101 = vmatpush1.msra.mxu0 0.0
    %102 = vmatprep.mubr.f32.mxu0 0.0
    %103 = vmatmul.mubr.f32.gmra.mrb[0].mxu0 %v21
    %v104 = vpop.f32.mrb[0].mxu0
    %v105 = vadd.f32 0.0, %v104
    %v106 = vpop.f32.mrb[0].mxu0
    %107 = vdwg.mxu0
    %v108 = vadd.f32 %v20, %v105
    %109 = vst [vmem:[#allocation2] sm:$0xff] %v108
    // Predicated region
    $region18: #{linear_forward.1} parent=1 // pred_check
      %p110 = pneg %p15
    $region19: #{linear_forward.1} parent=1 // pred_check_branch
      %112 = sbr.rel (%p110) target = $region21
    $region20: #{linear_forward.1} parent=1 // pred_region
      %v113 = vld [vmem:[#allocation2] sm:$0xff]
      %v114 = vld [vmem:[%s2] sm:$0x1]
      %v116 = vlaneseq
      %v117 = vshrl.u32 %v116, 7
      %v118 = vsub.s32 0, %v117
      %v119 = vrot.slane %v114, %v118
      %v121 = vadd.f32 %v113, %v119
      %122 = vst [vmem:[#allocation2] sm:$0xff] %v121
    $region21: #{linear_forward.1} parent=1 // pred_fallthru
      _
    // Predicated region
    $region22: #{linear_forward.1} parent=1 // pred_check
      _
    $region23: #{linear_forward.1} parent=1 // pred_check_branch
      %124 = sbr.rel (0) target = $region25
    $region24: #{linear_forward.1} parent=1 // pred_region
      %s126 = ssub.s32 128, 128
      %127 = vsyncadd [#allocation3], %s126
      %s129 = sshll.u32 [#allocation2], 4
      %s130 = int_to_ptr.vmem [resolvable:$true] %s129
      %132 = dma.vmem_to_hbm [thread:$0]  %s130, 128, %s3, [#allocation3]
    $region25: #{linear_forward.1} parent=1 // pred_fallthru
      _
    // Predicated region
    $region26: #{linear_forward.1} parent=1 // pred_check
      _
    $region27: #{linear_forward.1} parent=1 // pred_check_branch
      %134 = sbr.rel (0) target = $region29
    $region28: #{linear_forward.1} parent=1 // pred_region
      %135 = dma.done [#allocation3], 128
    $region29: #{linear_forward.1} parent=1 // pred_fallthru
      _
    %136 = vsyncpa [#allocation3], 1

</llo_original>
